<compile_context>
chip_gen: v6e
topology: v6e:2x2x1
jax: 0.10.0
libtpu: 0.0.40
codegen_flags: <defaults>
</compile_context>

<pallas_src>
from functools import partial

import numpy as np

import jax
import jax.numpy as jnp
from jax.experimental import pallas as pl
from jax.experimental.pallas import tpu as pltpu


_NEG = -1e30      # "minus infinity" that stays NaN-free through exp()
_H0 = 180         # conv0 Toeplitz features (6*6*5)
_H0_PAD = 256     # padded to a lane multiple of 128
_H1 = 128         # conv1 flattened features (4*4*8), already lane-aligned


# ---------------------------------------------------------------------------
# Pallas kernel: 3 matmuls + relu + global softmax, everything in VMEM.
# ---------------------------------------------------------------------------
def _policy_kernel(x_ref, m0_ref, b0_ref, m1_ref, b1_ref, w_ref, bk_ref,
                   o_ref, *, valid_rows):
    # x_ref  : (Bp, 64)     f32  flattened 8x8 board (row = h*8 + w), zero-padded rows
    # m0_ref : (64, 256)    f32  Toeplitz conv0 (cols 0..179 live, rest zero)
    # b0_ref : (1, 256)     f32
    # m1_ref : (256, 128)   f32  Toeplitz conv1 (rows 0..179 live, rest zero)
    # b1_ref : (1, 128)     f32
    # w_ref  : (128, Kp)    f32  dense weight with move filter folded in (padded cols zero)
    # bk_ref : (1, Kp)      f32  padded cols = -1e30
    # o_ref  : (Bp, Kp)     f32  globally-softmaxed selected scores
    h0 = jnp.dot(x_ref[...], m0_ref[...],
                 preferred_element_type=jnp.float32) + b0_ref[...]
    h0 = jnp.maximum(h0, 0.0)

    h1 = jnp.dot(h0, m1_ref[...],
                 preferred_element_type=jnp.float32) + b1_ref[...]
    h1 = jnp.maximum(h1, 0.0)

    scores = jnp.dot(h1, w_ref[...],
                     preferred_element_type=jnp.float32) + bk_ref[...]

    # Kill padded batch rows so they contribute exactly 0 to the softmax.
    row = jax.lax.broadcasted_iota(jnp.int32, scores.shape, 0)
    scores = jnp.where(row < valid_rows, scores, _NEG)

    # Global softmax over all (batch, move) pairs, matching
    # F.softmax(cat([x[:, i] for i in moves], dim=0).unsqueeze(0), dim=1).
    m = jnp.max(scores)
    e = jnp.exp(scores - m)
    o_ref[...] = e / jnp.sum(e)


# ---------------------------------------------------------------------------
# One-time parameter preparation (Toeplitz expansion + filter folding + padding).
# ---------------------------------------------------------------------------
def _shift_onehot(in_size, out_size):
    """m[k, i, o] = 1 iff i == o + k (valid-conv window selection)."""
    m = np.zeros((3, in_size, out_size), np.float32)
    for k in range(3):
        for o in range(out_size):
            m[k, o + k, o] = 1.0
    return jnp.asarray(m)


def prepare_policy_params(params, available_moves):
    """Pre-compute the 3 matmul weights; call once per (params, moves)."""
    w0, b0, w1, b1, wd, bd = params
    moves = np.asarray(available_moves, dtype=np.int32)
    K = int(moves.shape[0])
    k_pad = max(128, -(-K // 128) * 128)

    # conv0 (1 -> 5, 3x3, valid): Toeplitz (64, 180), out col = (oh*6+ow)*5 + co
    w0_t = jnp.transpose(w0, (2, 3, 1, 0))[:, :, 0, :]          # (ky, kx, co)
    py0 = _shift_onehot(8, 6)
    px0 = _shift_onehot(8, 6)
    m0 = jnp.einsum('kio,ljp,klc->ijopc', py0, px0, w0_t)       # (8,8,6,6,5)
    m0 = m0.reshape(64, _H0).astype(jnp.float32)
    b0r = jnp.tile(b0.reshape(5), (36,)).reshape(1, _H0).astype(jnp.float32)

    # conv1 (5 -> 8, 3x3, valid): Toeplitz (180, 128), out col = (oh*4+ow)*8 + co
    w1_t = jnp.transpose(w1, (2, 3, 1, 0))                      # (ky,kx,ci,co)
    py1 = _shift_onehot(6, 4)
    px1 = _shift_onehot(6, 4)
    m1 = jnp.einsum('kio,ljp,klcd->ijcopd', py1, px1, w1_t)     # (6,6,5,4,4,8)
    m1 = m1.reshape(_H0, _H1).astype(jnp.float32)
    b1r = jnp.tile(b1.reshape(8), (16,)).reshape(1, _H1).astype(jnp.float32)

    # Lane-pad hidden0 (180 -> 256); zero weights/bias keep relu outputs exact.
    m0 = jnp.pad(m0, ((0, 0), (0, _H0_PAD - _H0)))
    b0r = jnp.pad(b0r, ((0, 0), (0, _H0_PAD - _H0)))
    m1 = jnp.pad(m1, ((0, _H0_PAD - _H0), (0, 0)))

    # dense (128 -> 64): rows reordered to the (h*4+w)*8 + c flatten order,
    # then the move filter folded in by gathering the selected columns.
    wd_2d = jnp.transpose(wd.reshape(64, 8, 4, 4),
                          (2, 3, 1, 0)).reshape(128, 64).astype(jnp.float32)
    w_sel = jnp.pad(wd_2d[:, moves], ((0, 0), (0, k_pad - K)))   # (128, Kp)
    b_sel = jnp.pad(bd[moves].reshape(1, -1).astype(jnp.float32),
                    ((0, 0), (0, k_pad - K)),
                    constant_values=_NEG)                        # (1, Kp)

    return (m0, b0r, m1, b1r, w_sel, b_sel)


# ---------------------------------------------------------------------------
# Jitted forward (single dispatch: pad/reshape -> pallas kernel -> layout).
# ---------------------------------------------------------------------------
@partial(jax.jit, static_argnames=("k_actual",))
def policy_one_side_apply(x_nchw, m0, b0r, m1, b1r, w_sel, b_sel, *, k_actual):
    """x_nchw: (B, 1, 8, 8) f32.  Returns (1, K*B) probabilities."""
    B = x_nchw.shape[0]
    b_pad = -(-B // 8) * 8
    k_pad = w_sel.shape[1]

    x_flat = x_nchw.reshape(B, 64).astype(jnp.float32)   # C=1 -> row = h*8+w
    x_flat = jnp.pad(x_flat, ((0, b_pad - B), (0, 0)))   # sublane-align batch

    probs = pl.pallas_call(
        partial(_policy_kernel, valid_rows=B),
        out_shape=jax.ShapeDtypeStruct((b_pad, k_pad), jnp.float32),
        in_specs=[pl.BlockSpec(memory_space=pltpu.MemorySpace.VMEM)] * 7,
        out_specs=pl.BlockSpec(memory_space=pltpu.MemorySpace.VMEM),
    )(x_flat, m0, b0r, m1, b1r, w_sel, b_sel)

    # Drop padding; torch layout is cat over moves then batch: (1, j*B + b).
    sel = probs[:B, :k_actual]                            # (B, K)
    return sel.T.reshape(1, k_actual * B)


def policy_one_side_forward(x_nchw, params, available_moves):
    """Convenience entry point matching the PyTorch module's forward."""
    prepared = prepare_policy_params(params, available_moves)
    return policy_one_side_apply(x_nchw, *prepared,
                                 k_actual=len(available_moves))


# ---------------------------------------------------------------------------
# Pure-JAX reference of the original PyTorch module (for validation only).
# ---------------------------------------------------------------------------
def _reference_forward(x_nchw, params, available_moves):
    w0, b0, w1, b1, wd, bd = params

    def conv_valid(x, w, b):
        # x: (B, Cin, H, W), w: (Cout, Cin, 3, 3)
        H, W = x.shape[2], x.shape[3]
        acc = None
        for ky in range(3):
            for kx in range(3):
                win = x[:, :, ky:ky + H - 2, kx:kx + W - 2]
                t = jnp.einsum('bchw,oc->bohw', win, w[:, :, ky, kx])
                acc = t if acc is None else acc + t
        return acc + b[None, :, None, None]

    h0 = jnp.maximum(conv_valid(x_nchw, w0, b0), 0.0)
    h1 = jnp.maximum(conv_valid(h0, w1, b1), 0.0)
    B = x_nchw.shape[0]
    flat = h1.reshape(B, 128)                       # NCHW: c*16 + h*4 + w
    logits = flat @ wd.T + bd                       # (B, 64)
    moves = np.asarray(available_moves, dtype=np.int32)
    sel = logits[:, moves]                          # (B, K)
    flat_kb = sel.T.reshape(1, -1)                  # (1, K*B), index j*B + b
    return jax.nn.softmax(flat_kb, axis=1)


# ---------------------------------------------------------------------------
# Deterministic parameter init (PyTorch-style uniform(-1/sqrt(fan_in), ...))
# ---------------------------------------------------------------------------
def init_params(key):
    def unif(k, shape, fan_in):
        bound = 1.0 / jnp.sqrt(fan_in)
        return jax.random.uniform(k, shape, jnp.float32, -bound, bound)

    ks = jax.random.split(key, 6)
    w0 = unif(ks[0], (5, 1, 3, 3), 1 * 3 * 3)     # conv0.weight
    b0 = unif(ks[1], (5,), 1 * 3 * 3)             # conv0.bias
    w1 = unif(ks[2], (8, 5, 3, 3), 5 * 3 * 3)     # conv1.weight
    b1 = unif(ks[3], (8,), 5 * 3 * 3)             # conv1.bias
    wd = unif(ks[4], (64, 128), 128)              # dense0.weight
    bd = unif(ks[5], (64,), 128)                  # dense0.bias
    return (w0, b0, w1, b1, wd, bd)


if __name__ == "__main__":
    key = jax.random.PRNGKey(0)
    k_param, k_x = jax.random.split(key)

    params = init_params(k_param)

    # Input: (B, 1, 8, 8) NCHW — 8x8 board, single channel, so conv0 (->6x6)
    # and conv1 (->4x4) produce the 8*4*4 = 128 flattened features.
    B = 2
    x = jax.random.normal(k_x, (B, 1, 8, 8), dtype=jnp.float32)

    available_moves = [3, 7, 12, 21, 33, 40, 55, 63]  # K = 8 valid moves
    K = len(available_moves)

    # One-time prep (Toeplitz expansion + filter folding + padding), then call.
    prepared = prepare_policy_params(params, available_moves)
    out = policy_one_side_apply(x, *prepared, k_actual=K)
    out = jax.block_until_ready(out)

    # Sanity: output is a (1, K*B) probability vector summing to 1.
    assert out.shape == (1, K * B)
    assert abs(float(jnp.sum(out)) - 1.0) < 1e-4
    assert bool(jnp.all(out >= 0.0))

    # Numerical check against a pure-JAX reference of the PyTorch module.
    ref = _reference_forward(x, params, available_moves)
    np.testing.assert_allclose(np.asarray(out), np.asarray(ref),
                               rtol=1e-4, atol=1e-6)

    print("KERNEL_OK")
</pallas_src>

<mosaic_0001>
module attributes {stable_mosaic.version = 11 : i64} {
  func.func @_policy_kernel(%arg0: memref<8x64xf32, #tpu.memory_space<vmem>>, %arg1: memref<64x256xf32, #tpu.memory_space<vmem>>, %arg2: memref<1x256xf32, #tpu.memory_space<vmem>>, %arg3: memref<256x128xf32, #tpu.memory_space<vmem>>, %arg4: memref<1x128xf32, #tpu.memory_space<vmem>>, %arg5: memref<128x128xf32, #tpu.memory_space<vmem>>, %arg6: memref<1x128xf32, #tpu.memory_space<vmem>>, %arg7: memref<8x128xf32, #tpu.memory_space<vmem>>) attributes {dimension_semantics = [], scalar_prefetch = 0 : i64, scratch_operands = 0 : i64, tpu.core_type = #tpu.core_type<tc>} {
    %c0 = arith.constant 0 : index
    %c0_0 = arith.constant 0 : index
    %0 = vector.load %arg0[%c0, %c0_0] : memref<8x64xf32, #tpu.memory_space<vmem>>, vector<8x64xf32>
    %c0_1 = arith.constant 0 : index
    %c0_2 = arith.constant 0 : index
    %1 = vector.load %arg1[%c0_1, %c0_2] : memref<64x256xf32, #tpu.memory_space<vmem>>, vector<64x256xf32>
    %cst = arith.constant dense<0.000000e+00> : vector<8x256xf32>
    %2 = tpu.matmul %0, %1, %cst {dimension_numbers = #tpu.dot_dimension_numbers<[1], [0], [0], [1], [0, 0, 1, 1], [], []>} : vector<8x64xf32>, vector<64x256xf32>, vector<8x256xf32> -> vector<8x256xf32>
    %c0_3 = arith.constant 0 : index
    %c0_4 = arith.constant 0 : index
    %3 = vector.load %arg2[%c0_3, %c0_4] : memref<1x256xf32, #tpu.memory_space<vmem>>, vector<1x256xf32>
    %4 = vector.broadcast %3 : vector<1x256xf32> to vector<8x256xf32>
    %5 = arith.addf %2, %4 : vector<8x256xf32>
    %cst_5 = arith.constant 0.000000e+00 : f32
    %6 = vector.broadcast %cst_5 : f32 to vector<8x256xf32>
    %7 = arith.maximumf %5, %6 : vector<8x256xf32>
    %c0_6 = arith.constant 0 : index
    %c0_7 = arith.constant 0 : index
    %8 = vector.load %arg3[%c0_6, %c0_7] : memref<256x128xf32, #tpu.memory_space<vmem>>, vector<256x128xf32>
    %cst_8 = arith.constant dense<0.000000e+00> : vector<8x128xf32>
    %9 = tpu.matmul %7, %8, %cst_8 {dimension_numbers = #tpu.dot_dimension_numbers<[1], [0], [0], [1], [0, 0, 1, 1], [], []>} : vector<8x256xf32>, vector<256x128xf32>, vector<8x128xf32> -> vector<8x128xf32>
    %c0_9 = arith.constant 0 : index
    %c0_10 = arith.constant 0 : index
    %10 = vector.load %arg4[%c0_9, %c0_10] : memref<1x128xf32, #tpu.memory_space<vmem>>, vector<1x128xf32>
    %11 = vector.broadcast %10 : vector<1x128xf32> to vector<8x128xf32>
    %12 = arith.addf %9, %11 : vector<8x128xf32>
    %cst_11 = arith.constant 0.000000e+00 : f32
    %13 = vector.broadcast %cst_11 : f32 to vector<8x128xf32>
    %14 = arith.maximumf %12, %13 : vector<8x128xf32>
    %c0_12 = arith.constant 0 : index
    %c0_13 = arith.constant 0 : index
    %15 = vector.load %arg5[%c0_12, %c0_13] : memref<128x128xf32, #tpu.memory_space<vmem>>, vector<128x128xf32>
    %cst_14 = arith.constant dense<0.000000e+00> : vector<8x128xf32>
    %16 = tpu.matmul %14, %15, %cst_14 {dimension_numbers = #tpu.dot_dimension_numbers<[1], [0], [0], [1], [0, 0, 1, 1], [], []>} : vector<8x128xf32>, vector<128x128xf32>, vector<8x128xf32> -> vector<8x128xf32>
    %c0_15 = arith.constant 0 : index
    %c0_16 = arith.constant 0 : index
    %17 = vector.load %arg6[%c0_15, %c0_16] : memref<1x128xf32, #tpu.memory_space<vmem>>, vector<1x128xf32>
    %18 = vector.broadcast %17 : vector<1x128xf32> to vector<8x128xf32>
    %19 = arith.addf %16, %18 : vector<8x128xf32>
    %20 = tpu.iota {dimensions = array<i32: 0>} : vector<8x128xi32>
    %c2_i32 = arith.constant 2 : i32
    %21 = vector.broadcast %c2_i32 : i32 to vector<8x128xi32>
    %22 = arith.cmpi slt, %20, %21 : vector<8x128xi32>
    %cst_17 = arith.constant -1.000000e+30 : f32
    %23 = vector.broadcast %cst_17 : f32 to vector<8x128xf32>
    %24 = arith.select %22, %19, %23 : vector<8x128xi1>, vector<8x128xf32>
    %25 = vector.shape_cast %24 : vector<8x128xf32> to vector<1x8x128xf32>
    %cst_18 = arith.constant dense<0xFF800000> : vector<1xf32>
    %26 = vector.multi_reduction <maximumf>, %25, %cst_18 [1, 2] : vector<1x8x128xf32> to vector<1xf32>
    %27 = vector.shape_cast %26 : vector<1xf32> to vector<1x1x1xf32>
    %28 = vector.extract %27[0, 0, 0] : f32 from vector<1x1x1xf32>
    %29 = vector.broadcast %28 : f32 to vector<8x128xf32>
    %30 = arith.subf %24, %29 : vector<8x128xf32>
    %31 = math.exp %30 : vector<8x128xf32>
    %32 = vector.shape_cast %31 : vector<8x128xf32> to vector<1x8x128xf32>
    %cst_19 = arith.constant dense<0.000000e+00> : vector<1xf32>
    %33 = vector.multi_reduction <add>, %32, %cst_19 [1, 2] : vector<1x8x128xf32> to vector<1xf32>
    %34 = vector.shape_cast %33 : vector<1xf32> to vector<1x1x1xf32>
    %35 = vector.extract %34[0, 0, 0] : f32 from vector<1x1x1xf32>
    %36 = vector.broadcast %35 : f32 to vector<8x128xf32>
    %37 = arith.divf %31, %36 : vector<8x128xf32>
    %c0_20 = arith.constant 0 : index
    %c0_21 = arith.constant 0 : index
    %38 = vector.load %arg7[%c0_20, %c0_21] : memref<8x128xf32, #tpu.memory_space<vmem>>, vector<8x128xf32>
    tpu.vector_store %arg7[%c0_20, %c0_21], %37 {strides = array<i32>} : memref<8x128xf32, #tpu.memory_space<vmem>>, vector<8x128xf32>,
    return
  }
}

</mosaic_0001>

<llo_original>
// kernel: policy_one_side_apply.1
$region0: #{policy_one_side_apply.1}
  #allocation0 [shape = 'u32[]', space=smem, size = 0x4, offset = 0x4, fixed_abs, tag = 'smem constant byte address 0x4 - core index']
  #allocation1 [shape = 'u32[144,128]{1,0:T(1,128)}', space=vmem, size = 0x12000, scoped, tag = 'internal scratch']
  %s0 = inlined_call_operand.vmem [shape: f32[8,64], index: 0, kind: input, shape index: {}]
  %s1 = inlined_call_operand.hbm [shape: f32[64,256], index: 1, kind: input, shape index: {}]
  %s2 = inlined_call_operand.vmem [shape: f32[1,256], index: 2, kind: input, shape index: {}]
  %s3 = inlined_call_operand.hbm [shape: f32[256,128], index: 3, kind: input, shape index: {}]
  %s4 = inlined_call_operand.vmem [shape: f32[1,128], index: 4, kind: input, shape index: {}]
  %s5 = inlined_call_operand.hbm [shape: f32[128,128], index: 5, kind: input, shape index: {}]
  %s6 = inlined_call_operand.vmem [shape: f32[1,128], index: 6, kind: input, shape index: {}]
  %s7 = inlined_call_operand.vmem [shape: f32[8,128], index: 7, kind: output, shape index: {}]
  %s8 = sld [smem:[#allocation0]]
  $region50: #{policy_one_side_apply.1} parent=0
    _
  %s10 = ssub.s32 1, %s8
  %s11 = scalar_select 0, %s10, %s8
  $region1: #{policy_one_side_apply.1} parent=0
    #allocation2 [shape = 'u8[65536]{0}', space=vmem, size = 0x10000, scoped, tag = 'input window, operand 1, single buffered']
    #allocation3 [shape = 's32[1]{0}', space=sflag, size = 0x4, scoped, tag = 'scoped memory for policy_one_side_apply.1']
    #allocation4 [shape = 'u8[131072]{0}', space=vmem, size = 0x20000, scoped, tag = 'input window, operand 3, single buffered']
    #allocation5 [shape = 's32[1]{0}', space=sflag, size = 0x4, scoped, tag = 'scoped memory for policy_one_side_apply.1']
    #allocation6 [shape = 'u8[65536]{0}', space=vmem, size = 0x10000, scoped, tag = 'input window, operand 5, single buffered']
    %12 = vsyncpa [#allocation3], 0
    %13 = vsyncpa [#allocation5], 0
    // Predicated region
    $region2: #{policy_one_side_apply.1} parent=1 // pred_check
      _
    $region3: #{policy_one_side_apply.1} parent=1 // pred_check_branch
      %15 = sbr.rel (0) target = $region5
    $region4: #{policy_one_side_apply.1} parent=1 // pred_region
      _
    $region5: #{policy_one_side_apply.1} parent=1 // pred_fallthru
      _
    // Predicated region
    $region6: #{policy_one_side_apply.1} parent=1 // pred_check
      _
    $region7: #{policy_one_side_apply.1} parent=1 // pred_check_branch
      %17 = sbr.rel (0) target = $region9
    $region8: #{policy_one_side_apply.1} parent=1 // pred_region
      %s19 = ssub.s32 2048, 2048
      %20 = vsyncadd [#allocation3], %s19
      %s21 = sshll.u32 [#allocation2], 4
      %s22 = int_to_ptr.vmem [resolvable:$true] %s21
      %27 = dma.hbm_to_vmem [thread:$0]  %s1, 2048, %s22, [#allocation3], 256, 256, 16
    $region9: #{policy_one_side_apply.1} parent=1 // pred_fallthru
      _
    // Predicated region
    $region10: #{policy_one_side_apply.1} parent=1 // pred_check
      _
    $region11: #{policy_one_side_apply.1} parent=1 // pred_check_branch
      %29 = sbr.rel (0) target = $region13
    $region12: #{policy_one_side_apply.1} parent=1 // pred_region
      _
    $region13: #{policy_one_side_apply.1} parent=1 // pred_fallthru
      _
    // Predicated region
    $region14: #{policy_one_side_apply.1} parent=1 // pred_check
      _
    $region15: #{policy_one_side_apply.1} parent=1 // pred_check_branch
      %31 = sbr.rel (0) target = $region17
    $region16: #{policy_one_side_apply.1} parent=1 // pred_region
      %s33 = ssub.s32 4096, 4096
      %34 = vsyncadd [#allocation5], %s33
      %s35 = sshll.u32 [#allocation4], 4
      %s36 = int_to_ptr.vmem [resolvable:$true] %s35
      %41 = dma.hbm_to_vmem [thread:$0]  %s3, 4096, %s36, [#allocation5], 128, 128, 8
    $region17: #{policy_one_side_apply.1} parent=1 // pred_fallthru
      _
    // Predicated region
    $region18: #{policy_one_side_apply.1} parent=1 // pred_check
      _
    $region19: #{policy_one_side_apply.1} parent=1 // pred_check_branch
      %43 = sbr.rel (0) target = $region21
    $region20: #{policy_one_side_apply.1} parent=1 // pred_region
      _
    $region21: #{policy_one_side_apply.1} parent=1 // pred_fallthru
      _
    // Predicated region
    $region22: #{policy_one_side_apply.1} parent=1 // pred_check
      _
    $region23: #{policy_one_side_apply.1} parent=1 // pred_check_branch
      %45 = sbr.rel (0) target = $region25
    $region24: #{policy_one_side_apply.1} parent=1 // pred_region
      %s47 = ssub.s32 2048, 2048
      %48 = vsyncadd [#allocation5], %s47
      %s49 = sshll.u32 [#allocation6], 4
      %s50 = int_to_ptr.vmem [resolvable:$true] %s49
      %55 = dma.hbm_to_vmem [thread:$0]  %s5, 2048, %s50, [#allocation5], 128, 128, 8
    $region25: #{policy_one_side_apply.1} parent=1 // pred_fallthru
      _
    // Predicated region
    $region26: #{policy_one_side_apply.1} parent=1 // pred_check
      _
    $region27: #{policy_one_side_apply.1} parent=1 // pred_check_branch
      %57 = sbr.rel (0) target = $region29
    $region28: #{policy_one_side_apply.1} parent=1 // pred_region
      _
    $region29: #{policy_one_side_apply.1} parent=1 // pred_fallthru
      _
    // Predicated region
    $region30: #{policy_one_side_apply.1} parent=1 // pred_check
      _
    $region31: #{policy_one_side_apply.1} parent=1 // pred_check_branch
      %59 = sbr.rel (0) target = $region33
    $region32: #{policy_one_side_apply.1} parent=1 // pred_region
      %60 = dma.done [#allocation3], 2048
    $region33: #{policy_one_side_apply.1} parent=1 // pred_fallthru
      _
    // Predicated region
    $region34: #{policy_one_side_apply.1} parent=1 // pred_check
      _
    $region35: #{policy_one_side_apply.1} parent=1 // pred_check_branch
      %62 = sbr.rel (0) target = $region37
    $region36: #{policy_one_side_apply.1} parent=1 // pred_region
      %63 = dma.done [#allocation5], 4096
    $region37: #{policy_one_side_apply.1} parent=1 // pred_fallthru
      _
    // Predicated region
    $region38: #{policy_one_side_apply.1} parent=1 // pred_check
      _
    $region39: #{policy_one_side_apply.1} parent=1 // pred_check_branch
      %65 = sbr.rel (0) target = $region41
    $region40: #{policy_one_side_apply.1} parent=1 // pred_region
      %66 = dma.done [#allocation5], 2048
    $region41: #{policy_one_side_apply.1} parent=1 // pred_fallthru
      _
    %v67 = vld [vmem:[%s0] sm:$0xff]
    %v68 = vld [vmem:[#allocation2] sm:$0xff]
    %v69 = vld [vmem:[#allocation2 + $0x8] sm:$0xff]
    %v70 = vld [vmem:[#allocation2 + $0x10] sm:$0xff]
    %v71 = vld [vmem:[#allocation2 + $0x18] sm:$0xff]
    %v72 = vld [vmem:[#allocation2 + $0x20] sm:$0xff]
    %v73 = vld [vmem:[#allocation2 + $0x28] sm:$0xff]
    %v74 = vld [vmem:[#allocation2 + $0x30] sm:$0xff]
    %v75 = vld [vmem:[#allocation2 + $0x38] sm:$0xff]
    %v76 = vld [vmem:[#allocation2 + $0x40] sm:$0xff]
    %v77 = vld [vmem:[#allocation2 + $0x48] sm:$0xff]
    %v78 = vld [vmem:[#allocation2 + $0x50] sm:$0xff]
    %v79 = vld [vmem:[#allocation2 + $0x58] sm:$0xff]
    %v80 = vld [vmem:[#allocation2 + $0x60] sm:$0xff]
    %v81 = vld [vmem:[#allocation2 + $0x68] sm:$0xff]
    %v82 = vld [vmem:[#allocation2 + $0x70] sm:$0xff]
    %v83 = vld [vmem:[#allocation2 + $0x78] sm:$0xff]
    %v84 = vld [vmem:[%s2] sm:$0x3]
    %v86 = vlaneseq
    %v87 = vshrl.u32 %v86, 7
    %v88 = vsub.s32 0, %v87
    %v89 = vrot.slane %v84, %v88
    %v90 = vlaneseq
    %v91 = vshrl.u32 %v90, 7
    %v92 = vsub.s32 1, %v91
    %v93 = vrot.slane %v84, %v92
    %vm96 = vcmask 523264
    %v98 = vsel %vm96, %v67, 0
    %100 = vmatprep.subr.mxu0 0.0
    %101 = vmatpush1.msra.mxu0 0.0
    %102 = vmatprep.subr.mxu0 0.0
    %103 = vmatpush1.msra.mxu0 0.0
    %104 = vmatprep.subr.mxu0 0.0
    %105 = vmatpush1.msra.mxu0 0.0
    %106 = vmatprep.subr.mxu0 0.0
    %107 = vmatpush1.msra.mxu0 0.0
    %108 = vmatprep.subr.mxu0 0.0
    %109 = vmatpush1.msra.mxu0 0.0
    %110 = vmatprep.subr.mxu0 0.0
    %111 = vmatpush1.msra.mxu0 0.0
    %112 = vmatprep.subr.mxu0 0.0
    %113 = vmatpush1.msra.mxu0 0.0
    %114 = vmatprep.subr.mxu0 0.0
    %115 = vmatpush1.msra.mxu0 0.0
    %116 = vmatprep.subr.mxu0 %v83
    %117 = vmatpush1.msra.mxu0 %v82
    %118 = vmatprep.subr.mxu0 %v81
    %119 = vmatpush1.msra.mxu0 %v80
    %120 = vmatprep.subr.mxu0 %v79
    %121 = vmatpush1.msra.mxu0 %v78
    %122 = vmatprep.subr.mxu0 %v77
    %123 = vmatpush1.msra.mxu0 %v76
    %124 = vmatprep.subr.mxu0 %v75
    %125 = vmatpush1.msra.mxu0 %v74
    %126 = vmatprep.subr.mxu0 %v73
    %127 = vmatpush1.msra.mxu0 %v72
    %128 = vmatprep.subr.mxu0 %v71
    %129 = vmatpush1.msra.mxu0 %v70
    %130 = vmatprep.subr.mxu0 %v69
    %131 = vmatpush1.msra.mxu0 %v68
    %132 = vmatprep.subr.mxu0 0.0
    %133 = vmatpush2.msra.mxu0 0.0
    %134 = vmatprep.subr.mxu0 0.0
    %135 = vmatpush2.msra.mxu0 0.0
    %136 = vmatprep.subr.mxu0 0.0
    %137 = vmatpush2.msra.mxu0 0.0
    %138 = vmatprep.subr.mxu0 0.0
    %139 = vmatpush2.msra.mxu0 0.0
    %140 = vmatprep.subr.mxu0 0.0
    %141 = vmatpush2.msra.mxu0 0.0
    %142 = vmatprep.subr.mxu0 0.0
    %143 = vmatpush2.msra.mxu0 0.0
    %144 = vmatprep.subr.mxu0 0.0
    %145 = vmatpush2.msra.mxu0 0.0
    %146 = vmatprep.subr.mxu0 0.0
    %147 = vmatpush2.msra.mxu0 0.0
    %148 = vmatprep.subr.mxu0 0.0
    %149 = vmatpush2.msra.mxu0 0.0
    %150 = vmatprep.subr.mxu0 0.0
    %151 = vmatpush2.msra.mxu0 0.0
    %152 = vmatprep.subr.mxu0 0.0
    %153 = vmatpush2.msra.mxu0 0.0
    %154 = vmatprep.subr.mxu0 0.0
    %155 = vmatpush2.msra.mxu0 0.0
    %156 = vmatprep.subr.mxu0 0.0
    %157 = vmatpush2.msra.mxu0 0.0
    %158 = vmatprep.subr.mxu0 0.0
    %159 = vmatpush2.msra.mxu0 0.0
    %160 = vmatprep.subr.mxu0 0.0
    %161 = vmatpush2.msra.mxu0 0.0
    %162 = vmatprep.subr.mxu0 0.0
    %163 = vmatpush2.msra.mxu0 0.0
    %164 = vmatprep.mubr.f32.mxu0 0.0
    %165 = vmatmul.mubr.f32.gmra.mxu0 %v98
    %v166 = vpop.f32.mrf.mxu0
    %v167 = vadd.f32 %v89, %v166
    %v168 = vpop.f32.mrf.mxu0
    %v169 = vadd.f32 %v93, %v168
    %170 = vdwg.mxu0
    %v171 = vmax.f32 %v167, 0.0
    %v172 = vmax.f32 %v169, 0.0
    %v173 = vld [vmem:[#allocation4] sm:$0xff]
    %v174 = vld [vmem:[#allocation4 + $0x8] sm:$0xff]
    %v175 = vld [vmem:[#allocation4 + $0x10] sm:$0xff]
    %v176 = vld [vmem:[#allocation4 + $0x18] sm:$0xff]
    %v177 = vld [vmem:[#allocation4 + $0x20] sm:$0xff]
    %v178 = vld [vmem:[#allocation4 + $0x28] sm:$0xff]
    %v179 = vld [vmem:[#allocation4 + $0x30] sm:$0xff]
    %v180 = vld [vmem:[#allocation4 + $0x38] sm:$0xff]
    %v181 = vld [vmem:[#allocation4 + $0x40] sm:$0xff]
    %v182 = vld [vmem:[#allocation4 + $0x48] sm:$0xff]
    %v183 = vld [vmem:[#allocation4 + $0x50] sm:$0xff]
    %v184 = vld [vmem:[#allocation4 + $0x58] sm:$0xff]
    %v185 = vld [vmem:[#allocation4 + $0x60] sm:$0xff]
    %v186 = vld [vmem:[#allocation4 + $0x68] sm:$0xff]
    %v187 = vld [vmem:[#allocation4 + $0x70] sm:$0xff]
    %v188 = vld [vmem:[#allocation4 + $0x78] sm:$0xff]
    %v189 = vld [vmem:[#allocation4 + $0x80] sm:$0xff]
    %v190 = vld [vmem:[#allocation4 + $0x88] sm:$0xff]
    %v191 = vld [vmem:[#allocation4 + $0x90] sm:$0xff]
    %v192 = vld [vmem:[#allocation4 + $0x98] sm:$0xff]
    %v193 = vld [vmem:[#allocation4 + $0xa0] sm:$0xff]
    %v194 = vld [vmem:[#allocation4 + $0xa8] sm:$0xff]
    %v195 = vld [vmem:[#allocation4 + $0xb0] sm:$0xff]
    %v196 = vld [vmem:[#allocation4 + $0xb8] sm:$0xff]
    %v197 = vld [vmem:[#allocation4 + $0xc0] sm:$0xff]
    %v198 = vld [vmem:[#allocation4 + $0xc8] sm:$0xff]
    %v199 = vld [vmem:[#allocation4 + $0xd0] sm:$0xff]
    %v200 = vld [vmem:[#allocation4 + $0xd8] sm:$0xff]
    %v201 = vld [vmem:[#allocation4 + $0xe0] sm:$0xff]
    %v202 = vld [vmem:[#allocation4 + $0xe8] sm:$0xff]
    %v203 = vld [vmem:[#allocation4 + $0xf0] sm:$0xff]
    %v204 = vld [vmem:[#allocation4 + $0xf8] sm:$0xff]
    %v205 = vld [vmem:[%s4] sm:$0x1]
    %v207 = vlaneseq
    %v208 = vshrl.u32 %v207, 7
    %v209 = vsub.s32 0, %v208
    %v210 = vrot.slane %v205, %v209
    %212 = vmatprep.subr.mxu0 0.0
    %213 = vmatpush1.msra.mxu0 %v188
    %214 = vmatprep.subr.mxu0 0.0
    %215 = vmatpush1.msra.mxu0 %v187
    %216 = vmatprep.subr.mxu0 0.0
    %217 = vmatpush1.msra.mxu0 %v186
    %218 = vmatprep.subr.mxu0 0.0
    %219 = vmatpush1.msra.mxu0 %v185
    %220 = vmatprep.subr.mxu0 0.0
    %221 = vmatpush1.msra.mxu0 %v184
    %222 = vmatprep.subr.mxu0 0.0
    %223 = vmatpush1.msra.mxu0 %v183
    %224 = vmatprep.subr.mxu0 0.0
    %225 = vmatpush1.msra.mxu0 %v182
    %226 = vmatprep.subr.mxu0 0.0
    %227 = vmatpush1.msra.mxu0 %v181
    %228 = vmatprep.subr.mxu0 0.0
    %229 = vmatpush1.msra.mxu0 %v180
    %230 = vmatprep.subr.mxu0 0.0
    %231 = vmatpush1.msra.mxu0 %v179
    %232 = vmatprep.subr.mxu0 0.0
    %233 = vmatpush1.msra.mxu0 %v178
    %234 = vmatprep.subr.mxu0 0.0
    %235 = vmatpush1.msra.mxu0 %v177
    %236 = vmatprep.subr.mxu0 0.0
    %237 = vmatpush1.msra.mxu0 %v176
    %238 = vmatprep.subr.mxu0 0.0
    %239 = vmatpush1.msra.mxu0 %v175
    %240 = vmatprep.subr.mxu0 0.0
    %241 = vmatpush1.msra.mxu0 %v174
    %242 = vmatprep.subr.mxu0 0.0
    %243 = vmatpush1.msra.mxu0 %v173
    %244 = vmatprep.subr.mxu0 0.0
    %245 = vmatpush2.msra.mxu0 %v204
    %246 = vmatprep.subr.mxu0 0.0
    %247 = vmatpush2.msra.mxu0 %v203
    %248 = vmatprep.subr.mxu0 0.0
    %249 = vmatpush2.msra.mxu0 %v202
    %250 = vmatprep.subr.mxu0 0.0
    %251 = vmatpush2.msra.mxu0 %v201
    %252 = vmatprep.subr.mxu0 0.0
    %253 = vmatpush2.msra.mxu0 %v200
    %254 = vmatprep.subr.mxu0 0.0
    %255 = vmatpush2.msra.mxu0 %v199
    %256 = vmatprep.subr.mxu0 0.0
    %257 = vmatpush2.msra.mxu0 %v198
    %258 = vmatprep.subr.mxu0 0.0
    %259 = vmatpush2.msra.mxu0 %v197
    %260 = vmatprep.subr.mxu0 0.0
    %261 = vmatpush2.msra.mxu0 %v196
    %262 = vmatprep.subr.mxu0 0.0
    %263 = vmatpush2.msra.mxu0 %v195
    %264 = vmatprep.subr.mxu0 0.0
    %265 = vmatpush2.msra.mxu0 %v194
    %266 = vmatprep.subr.mxu0 0.0
    %267 = vmatpush2.msra.mxu0 %v193
    %268 = vmatprep.subr.mxu0 0.0
    %269 = vmatpush2.msra.mxu0 %v192
    %270 = vmatprep.subr.mxu0 0.0
    %271 = vmatpush2.msra.mxu0 %v191
    %272 = vmatprep.subr.mxu0 0.0
    %273 = vmatpush2.msra.mxu0 %v190
    %274 = vmatprep.subr.mxu0 0.0
    %275 = vmatpush2.msra.mxu0 %v189
    %276 = vmatprep.mubr.f32.mxu0 %v172
    %277 = vmatmul.mubr.f32.gmra.mxu0 %v171
    %v278 = vpop.f32.mrf.mxu0
    %v279 = vadd.f32 %v210, %v278
    %v280 = vpop.f32.mrf.mxu0
    %281 = vdwg.mxu0
    %v282 = vmax.f32 %v279, 0.0
    %v283 = vld [vmem:[#allocation6] sm:$0xff]
    %v284 = vld [vmem:[#allocation6 + $0x8] sm:$0xff]
    %v285 = vld [vmem:[#allocation6 + $0x10] sm:$0xff]
    %v286 = vld [vmem:[#allocation6 + $0x18] sm:$0xff]
    %v287 = vld [vmem:[#allocation6 + $0x20] sm:$0xff]
    %v288 = vld [vmem:[#allocation6 + $0x28] sm:$0xff]
    %v289 = vld [vmem:[#allocation6 + $0x30] sm:$0xff]
    %v290 = vld [vmem:[#allocation6 + $0x38] sm:$0xff]
    %v291 = vld [vmem:[#allocation6 + $0x40] sm:$0xff]
    %v292 = vld [vmem:[#allocation6 + $0x48] sm:$0xff]
    %v293 = vld [vmem:[#allocation6 + $0x50] sm:$0xff]
    %v294 = vld [vmem:[#allocation6 + $0x58] sm:$0xff]
    %v295 = vld [vmem:[#allocation6 + $0x60] sm:$0xff]
    %v296 = vld [vmem:[#allocation6 + $0x68] sm:$0xff]
    %v297 = vld [vmem:[#allocation6 + $0x70] sm:$0xff]
    %v298 = vld [vmem:[#allocation6 + $0x78] sm:$0xff]
    %v299 = vld [vmem:[%s6] sm:$0x1]
    %v301 = vlaneseq
    %v302 = vshrl.u32 %v301, 7
    %v303 = vsub.s32 0, %v302
    %v304 = vrot.slane %v299, %v303
    %306 = vmatprep.subr.mxu0 0.0
    %307 = vmatpush1.msra.mxu0 %v298
    %308 = vmatprep.subr.mxu0 0.0
    %309 = vmatpush1.msra.mxu0 %v297
    %310 = vmatprep.subr.mxu0 0.0
    %311 = vmatpush1.msra.mxu0 %v296
    %312 = vmatprep.subr.mxu0 0.0
    %313 = vmatpush1.msra.mxu0 %v295
    %314 = vmatprep.subr.mxu0 0.0
    %315 = vmatpush1.msra.mxu0 %v294
    %316 = vmatprep.subr.mxu0 0.0
    %317 = vmatpush1.msra.mxu0 %v293
    %318 = vmatprep.subr.mxu0 0.0
    %319 = vmatpush1.msra.mxu0 %v292
    %320 = vmatprep.subr.mxu0 0.0
    %321 = vmatpush1.msra.mxu0 %v291
    %322 = vmatprep.subr.mxu0 0.0
    %323 = vmatpush1.msra.mxu0 %v290
    %324 = vmatprep.subr.mxu0 0.0
    %325 = vmatpush1.msra.mxu0 %v289
    %326 = vmatprep.subr.mxu0 0.0
    %327 = vmatpush1.msra.mxu0 %v288
    %328 = vmatprep.subr.mxu0 0.0
    %329 = vmatpush1.msra.mxu0 %v287
    %330 = vmatprep.subr.mxu0 0.0
    %331 = vmatpush1.msra.mxu0 %v286
    %332 = vmatprep.subr.mxu0 0.0
    %333 = vmatpush1.msra.mxu0 %v285
    %334 = vmatprep.subr.mxu0 0.0
    %335 = vmatpush1.msra.mxu0 %v284
    %336 = vmatprep.subr.mxu0 0.0
    %337 = vmatpush1.msra.mxu0 %v283
    %338 = vmatprep.subr.mxu0 0.0
    %339 = vmatpush2.msra.mxu0 0.0
    %340 = vmatprep.subr.mxu0 0.0
    %341 = vmatpush2.msra.mxu0 0.0
    %342 = vmatprep.subr.mxu0 0.0
    %343 = vmatpush2.msra.mxu0 0.0
    %344 = vmatprep.subr.mxu0 0.0
    %345 = vmatpush2.msra.mxu0 0.0
    %346 = vmatprep.subr.mxu0 0.0
    %347 = vmatpush2.msra.mxu0 0.0
    %348 = vmatprep.subr.mxu0 0.0
    %349 = vmatpush2.msra.mxu0 0.0
    %350 = vmatprep.subr.mxu0 0.0
    %351 = vmatpush2.msra.mxu0 0.0
    %352 = vmatprep.subr.mxu0 0.0
    %353 = vmatpush2.msra.mxu0 0.0
    %354 = vmatprep.subr.mxu0 0.0
    %355 = vmatpush2.msra.mxu0 0.0
    %356 = vmatprep.subr.mxu0 0.0
    %357 = vmatpush2.msra.mxu0 0.0
    %358 = vmatprep.subr.mxu0 0.0
    %359 = vmatpush2.msra.mxu0 0.0
    %360 = vmatprep.subr.mxu0 0.0
    %361 = vmatpush2.msra.mxu0 0.0
    %362 = vmatprep.subr.mxu0 0.0
    %363 = vmatpush2.msra.mxu0 0.0
    %364 = vmatprep.subr.mxu0 0.0
    %365 = vmatpush2.msra.mxu0 0.0
    %366 = vmatprep.subr.mxu0 0.0
    %367 = vmatpush2.msra.mxu0 0.0
    %368 = vmatprep.subr.mxu0 0.0
    %369 = vmatpush2.msra.mxu0 0.0
    %370 = vmatprep.mubr.f32.mxu0 0.0
    %371 = vmatmul.mubr.f32.gmra.mxu0 %v282
    %v372 = vpop.f32.mrf.mxu0
    %v373 = vadd.f32 %v304, %v372
    %v374 = vpop.f32.mrf.mxu0
    %375 = vdwg.mxu0
    %v376 = vlaneseq
    %v377 = vshrl.u32 %v376, 7
    %vm378 = vcmp.lt.s32.totalorder %v377, 2
    %v379 = vsel %vm378, %v373, -1e+30
    %380 = vmax.xlane.f32.xlu0 %v379
    %v381 = vpop.xlane.xlu0 %380
    %v382 = vrot.slane %v381, 4
    %v383 = vmax.f32 %v381, %v382
    %v384 = vrot.slane %v383, 2
    %v385 = vmax.f32 %v383, %v384
    %v386 = vrot.slane %v385, 1
    %v387 = vmax.f32 %v385, %v386
    %s388 = vtos %v387
    %v389 = vstv %s388
    %v390 = vsub.f32 %v379, %v389
    %v391 = vmul.f32 %v390, 1.442695
    %v392 = vpow.pop %v391
    %393 = vadd.xlane.f32.xlu0 %v392
    %v394 = vpop.xlane.xlu0 %393
    %v395 = vrot.slane %v394, 4
    %v396 = vadd.f32 %v394, %v395
    %v397 = vrot.slane %v396, 2
    %v398 = vadd.f32 %v396, %v397
    %v399 = vrot.slane %v398, 1
    %v400 = vadd.f32 %v398, %v399
    %s401 = vtos %v400
    %v402 = vstv %s401
    %v403 = vrcp.pop %v402
    %v404 = vmul.f32 %v392, %v403
    %405 = vst [vmem:[%s7] sm:$0xff] %v404
    // Predicated region
    $region42: #{policy_one_side_apply.1} parent=1 // pred_check
      _
    $region43: #{policy_one_side_apply.1} parent=1 // pred_check_branch
      %407 = sbr.rel (0) target = $region45
    $region44: #{policy_one_side_apply.1} parent=1 // pred_region
      _
    $region45: #{policy_one_side_apply.1} parent=1 // pred_fallthru
      _
    // Predicated region
    $region46: #{policy_one_side_apply.1} parent=1 // pred_check
      _
    $region47: #{policy_one_side_apply.1} parent=1 // pred_check_branch
      %409 = sbr.rel (0) target = $region49
    $region48: #{policy_one_side_apply.1} parent=1 // pred_region
      _
    $region49: #{policy_one_side_apply.1} parent=1 // pred_fallthru
      _
    %410 = vsyncpa [#allocation3], 1
    %411 = vsyncpa [#allocation5], 1

</llo_original>
